<compile_context>
chip_gen: v7x
topology: tpu7x:2x2x1
jax: 0.10.0
libtpu: 0.0.40
codegen_flags: <defaults>
</compile_context>

<pallas_src>
import math
import functools
from typing import NamedTuple

import numpy as np
import jax
import jax.numpy as jnp
from jax import lax
from jax.experimental import pallas as pl
from jax.experimental.pallas import tpu as pltpu

LN_EPS = 1e-5  # PyTorch nn.LayerNorm default


def _round_up(v, m):
    return (v + m - 1) // m * m


# ----------------------------------------------------------------------------
# Parameter preparation (hoisted out of the forward path).
# ----------------------------------------------------------------------------
class ProjectionParams(NamedTuple):
    gamma: jax.Array   # (1, Dc)           f32
    beta: jax.Array    # (1, Dc)           f32
    w1: jax.Array      # (Dc, Dp_pad)      matmul dtype
    b1: jax.Array      # (1, Dp_pad)       f32
    w2: jax.Array      # (Dp_pad, Dp_pad)  matmul dtype
    b2: jax.Array      # (1, Dp_pad)       f32


def prepare_projection_params(gamma, beta, w1, b1, w2, b2,
                              *, matmul_dtype=jnp.bfloat16):
    """Pad the projection width to a lane-dense multiple of 128 and cast the
    weights to the MXU dtype ONCE. Zero padding is exact. Returns (params, Dp)."""
    Dc, Dp = w1.shape
    Dp_pad = _round_up(Dp, 128)
    pad = Dp_pad - Dp
    params = ProjectionParams(
        gamma=jnp.asarray(gamma).reshape(1, Dc).astype(jnp.float32),
        beta=jnp.asarray(beta).reshape(1, Dc).astype(jnp.float32),
        w1=jnp.pad(w1, ((0, 0), (0, pad))).astype(matmul_dtype),
        b1=jnp.pad(b1, (0, pad)).reshape(1, Dp_pad).astype(jnp.float32),
        w2=jnp.pad(w2, ((0, pad), (0, pad))).astype(matmul_dtype),
        b2=jnp.pad(b2, (0, pad)).reshape(1, Dp_pad).astype(jnp.float32),
    )
    return params, Dp


# ----------------------------------------------------------------------------
# In-kernel math helpers (f32 elementwise; correct regime for v5e's no-bf16 VPU)
# ----------------------------------------------------------------------------
def _layernorm_f32(x, gamma, beta):
    # One pass over x: fused sum / sum-of-squares (halves XLU reduction work).
    mean = jnp.mean(x, axis=-1, keepdims=True)
    msq = jnp.mean(x * x, axis=-1, keepdims=True)
    var = jnp.maximum(msq - mean * mean, 0.0)
    return (x - mean) * lax.rsqrt(var + LN_EPS) * gamma + beta


def _gelu_f32(h, approximate):
    if approximate:
        # tanh form: transcendental goes to the EUP slot (win on v6e/v7x when
        # the VALU is saturating); slightly different numerics vs nn.GELU().
        return jax.nn.gelu(h, approximate=True)
    # Exact erf-based GELU == PyTorch nn.GELU() default.
    return 0.5 * h * (1.0 + lax.erf(h * (1.0 / math.sqrt(2.0))))


# ----------------------------------------------------------------------------
# Kernels
# ----------------------------------------------------------------------------
def _projection_kernel_fused(x_ref, gamma_ref, beta_ref, w1_ref, b1_ref,
                             w2_ref, b2_ref, o_ref, *, matmul_dtype,
                             approx_gelu):
    # Hoist small broadcast operands once per tile (JAX doesn't CSE broadcasts).
    gamma = gamma_ref[...].astype(jnp.float32)
    beta = beta_ref[...].astype(jnp.float32)
    b1 = b1_ref[...].astype(jnp.float32)
    b2 = b2_ref[...].astype(jnp.float32)

    x = x_ref[...].astype(jnp.float32)
    xn = _layernorm_f32(x, gamma, beta)

    h = jnp.dot(xn.astype(matmul_dtype), w1_ref[...],
                preferred_element_type=jnp.float32) + b1
    h = _gelu_f32(h, approx_gelu)
    out = jnp.dot(h.astype(matmul_dtype), w2_ref[...],
                  preferred_element_type=jnp.float32) + b2
    o_ref[...] = out.astype(o_ref.dtype)


def _projection_kernel_coltiled(x_ref, gamma_ref, beta_ref, w1_ref, b1_ref,
                                w2_ref, b2_ref, o_ref, h_ref, *,
                                matmul_dtype, approx_gelu):
    j = pl.program_id(1)

    @pl.when(j == 0)
    def _():
        # LayerNorm + matmul1 + GELU once per row tile; cached in VMEM scratch
        # (already in the MXU dtype) for every w2 column tile.
        gamma = gamma_ref[...].astype(jnp.float32)
        beta = beta_ref[...].astype(jnp.float32)
        b1 = b1_ref[...].astype(jnp.float32)
        x = x_ref[...].astype(jnp.float32)
        xn = _layernorm_f32(x, gamma, beta)
        h = jnp.dot(xn.astype(matmul_dtype), w1_ref[...],
                    preferred_element_type=jnp.float32) + b1
        h_ref[...] = _gelu_f32(h, approx_gelu).astype(matmul_dtype)

    out = jnp.dot(h_ref[...], w2_ref[...], preferred_element_type=jnp.float32)
    o_ref[...] = (out + b2_ref[...].astype(jnp.float32)).astype(o_ref.dtype)


# ----------------------------------------------------------------------------
# Tiling / VMEM budgeting
# ----------------------------------------------------------------------------
def _vmem_budget():
    cap = None
    try:
        cap = getattr(pltpu.get_tpu_info(), "vmem_capacity_bytes", None)
    except Exception:
        cap = None
    if not cap:
        cap = 64 << 20  # conservative: v7x per-TensorCore VMEM
    return int(cap * 0.85)


def _choose_tiles(N, Dc, Dp_pad, tm_target, tn_req, x_bytes, w_bytes,
                  out_bytes, budget):
    tm = max(8, min(_round_up(tm_target, 8), _round_up(N, 8)))

    def fused_need(tm_):
        return (2 * tm_ * Dc * x_bytes                       # x tile (x2 buf)
                + 2 * tm_ * Dp_pad * out_bytes               # out tile (x2 buf)
                + (Dc * Dp_pad + Dp_pad * Dp_pad) * w_bytes  # resident weights
                + (2 * Dc + 2 * Dp_pad) * 4                  # gamma/beta/b1/b2
                + tm_ * Dc * 4 + 2 * tm_ * Dp_pad * 4        # f32 intermediates
                + tm_ * Dp_pad * w_bytes)                    # h cast for MXU

    def col_need(tm_, tn_):
        return (2 * tm_ * Dc * x_bytes
                + 2 * tm_ * tn_ * out_bytes
                + Dc * Dp_pad * w_bytes                      # w1 resident
                + 2 * Dp_pad * tn_ * w_bytes                 # w2 col tile (x2)
                + tm_ * Dp_pad * w_bytes                     # h scratch
                + (2 * Dc + Dp_pad + 2 * tn_) * 4
                + tm_ * Dc * 4 + tm_ * Dp_pad * 4 + tm_ * tn_ * 4)

    if tn_req is not None:
        return tm, min(_round_up(tn_req, 128), Dp_pad)

    if fused_need(tm) <= budget:
        return tm, Dp_pad  # w2 fully resident, single grid axis

    tn_cands = [t for t in range(128, Dp_pad + 1, 128) if Dp_pad % t == 0]
    while True:
        for tn in reversed(tn_cands):
            if col_need(tm, tn) <= budget:
                return tm, tn
        if tm <= 64:
            return tm, tn_cands[0]  # best effort
        tm = max(64, _round_up(tm // 2, 8))


def _const_spec(shape, index_map, single_buffer):
    if single_buffer:
        # Constant-index blocks never change across the grid: one buffer only.
        return pl.BlockSpec(shape, index_map, pipeline_mode=pl.Buffered(1))
    return pl.BlockSpec(shape, index_map)


# ----------------------------------------------------------------------------
# pallas_call builders
# ----------------------------------------------------------------------------
def _build_fused(N, Dc, Dp_pad, tm, out_dtype, matmul_dtype, approx_gelu,
                 vmem_limit, cost, single_buffer_consts):
    c = lambda shape: _const_spec(shape, lambda i: (0, 0), single_buffer_consts)
    in_specs = [
        pl.BlockSpec((tm, Dc), lambda i: (i, 0)),   # x rows
        c((1, Dc)),                                 # gamma
        c((1, Dc)),                                 # beta
        c((Dc, Dp_pad)),                            # w1 (resident)
        c((1, Dp_pad)),                             # b1
        c((Dp_pad, Dp_pad)),                        # w2 (resident)
        c((1, Dp_pad)),                             # b2
    ]
    return pl.pallas_call(
        functools.partial(_projection_kernel_fused,
                          matmul_dtype=matmul_dtype, approx_gelu=approx_gelu),
        out_shape=jax.ShapeDtypeStruct((N, Dp_pad), out_dtype),
        grid=(pl.cdiv(N, tm),),
        in_specs=in_specs,
        out_specs=pl.BlockSpec((tm, Dp_pad), lambda i: (i, 0)),
        compiler_params=pltpu.CompilerParams(
            dimension_semantics=("parallel",),
            vmem_limit_bytes=vmem_limit),
        cost_estimate=cost,
    )


def _build_coltiled(N, Dc, Dp_pad, tm, tn, out_dtype, matmul_dtype, approx_gelu,
                    vmem_limit, cost, single_buffer_consts):
    c = lambda shape: _const_spec(shape, lambda i, j: (0, 0), single_buffer_consts)
    in_specs = [
        pl.BlockSpec((tm, Dc), lambda i, j: (i, 0)),     # x rows
        c((1, Dc)),                                      # gamma
        c((1, Dc)),                                      # beta
        c((Dc, Dp_pad)),                                 # w1 (resident)
        c((1, Dp_pad)),                                  # b1
        pl.BlockSpec((Dp_pad, tn), lambda i, j: (0, j)),  # w2 column tile
        pl.BlockSpec((1, tn), lambda i, j: (0, j)),       # b2 column tile
    ]
    return pl.pallas_call(
        functools.partial(_projection_kernel_coltiled,
                          matmul_dtype=matmul_dtype, approx_gelu=approx_gelu),
        out_shape=jax.ShapeDtypeStruct((N, Dp_pad), out_dtype),
        grid=(pl.cdiv(N, tm), pl.cdiv(Dp_pad, tn)),
        in_specs=in_specs,
        out_specs=pl.BlockSpec((tm, tn), lambda i, j: (i, j)),
        scratch_shapes=[pltpu.VMEM((tm, Dp_pad), matmul_dtype)],
        compiler_params=pltpu.CompilerParams(
            # Column axis MUST stay the inner 'arbitrary' axis: the h scratch
            # written at j == 0 is reused for every j on the same core.
            dimension_semantics=("parallel", "arbitrary"),
            vmem_limit_bytes=vmem_limit),
        cost_estimate=cost,
    )


# ----------------------------------------------------------------------------
# Forward wrappers
# ----------------------------------------------------------------------------
def projection_block_apply(x, params, d_out=None, *, tm=512, tn=None,
                           out_dtype=None, approx_gelu=False):
    """x: [..., Dc] -> [..., d_out]. `params` from prepare_projection_params."""
    *lead, Dc = x.shape
    Dp_pad = params.w1.shape[1]
    if d_out is None:
        d_out = Dp_pad
    matmul_dtype = params.w1.dtype
    out_dtype = out_dtype or x.dtype

    N = 1
    for d in lead:
        N *= d
    x2 = x.reshape(N, Dc)

    x_bytes = np.dtype(x.dtype).itemsize
    w_bytes = np.dtype(matmul_dtype).itemsize
    out_bytes = np.dtype(out_dtype).itemsize

    budget = _vmem_budget()
    tm, tn = _choose_tiles(N, Dc, Dp_pad, tm, tn, x_bytes, w_bytes, out_bytes,
                           budget)

    cost = pl.CostEstimate(
        flops=2 * N * (Dc * Dp_pad + Dp_pad * Dp_pad) + 10 * N * Dc,
        transcendentals=N * Dp_pad,
        bytes_accessed=(N * Dc * x_bytes + N * Dp_pad * out_bytes
                        + (Dc * Dp_pad + Dp_pad * Dp_pad) * w_bytes
                        + (2 * Dc + 2 * Dp_pad) * 4))

    args = (x2, params.gamma, params.beta, params.w1, params.b1,
            params.w2, params.b2)

    def run(single_buffer_consts):
        if tn >= Dp_pad:
            call = _build_fused(N, Dc, Dp_pad, tm, out_dtype, matmul_dtype,
                                approx_gelu, budget, cost, single_buffer_consts)
        else:
            call = _build_coltiled(N, Dc, Dp_pad, tm, tn, out_dtype,
                                   matmul_dtype, approx_gelu, budget, cost,
                                   single_buffer_consts)
        return call(*args)

    try:
        out = run(True)       # constants single-buffered (VMEM savings)
    except Exception:
        out = run(False)      # fallback: default double-buffered constants

    if d_out != Dp_pad:
        out = out[:, :d_out]
    return out.reshape(*lead, d_out)


def projection_block(x, gamma, beta, w1, b1, w2, b2, *,
                     matmul_dtype=jnp.bfloat16, **kwargs):
    """One-shot convenience wrapper. In real use, hoist
    prepare_projection_params() out of the forward path."""
    params, d_out = prepare_projection_params(gamma, beta, w1, b1, w2, b2,
                                              matmul_dtype=matmul_dtype)
    return projection_block_apply(x, params, d_out, **kwargs)


def projection_block_ref(x, gamma, beta, w1, b1, w2, b2):
    mean = jnp.mean(x, axis=-1, keepdims=True)
    var = jnp.mean((x - mean) ** 2, axis=-1, keepdims=True)
    xn = (x - mean) * lax.rsqrt(var + LN_EPS) * gamma + beta
    h = xn @ w1 + b1
    h = 0.5 * h * (1.0 + lax.erf(h / math.sqrt(2.0)))
    return h @ w2 + b2


if __name__ == "__main__":
    # Small shapes consistent with the module: [B, S, D_clip] -> [B, S, D_phi2]
    B, S = 2, 8
    D_CLIP, D_PHI2 = 32, 64

    key = jax.random.PRNGKey(0)
    kx, k1, k2, k3, k4 = jax.random.split(key, 5)

    x = jax.random.normal(kx, (B, S, D_CLIP), dtype=jnp.float32)
    gamma = jnp.ones((D_CLIP,), jnp.float32)   # PyTorch LayerNorm init
    beta = jnp.zeros((D_CLIP,), jnp.float32)
    w1 = jax.random.normal(k1, (D_CLIP, D_PHI2), jnp.float32) / math.sqrt(D_CLIP)
    b1 = jax.random.normal(k2, (D_PHI2,), jnp.float32) * 0.01
    w2 = jax.random.normal(k3, (D_PHI2, D_PHI2), jnp.float32) / math.sqrt(D_PHI2)
    b2 = jax.random.normal(k4, (D_PHI2,), jnp.float32) * 0.01

    ref = projection_block_ref(x, gamma, beta, w1, b1, w2, b2)

    # 1) Exact f32-matmul path: tight numerical check of the fused kernel.
    p_f32, d_out = prepare_projection_params(gamma, beta, w1, b1, w2, b2,
                                             matmul_dtype=jnp.float32)
    out_f32 = jax.block_until_ready(projection_block_apply(x, p_f32, d_out))
    assert out_f32.shape == (B, S, D_PHI2)
    assert jnp.allclose(out_f32, ref, atol=1e-4, rtol=1e-4)

    # 2) Default perf path: bf16 MXU operands with f32 accumulation.
    p_bf16, d_out = prepare_projection_params(gamma, beta, w1, b1, w2, b2)
    out = jax.block_until_ready(projection_block_apply(x, p_bf16, d_out))
    assert out.shape == (B, S, D_PHI2)
    assert jnp.allclose(out, ref, atol=5e-2, rtol=5e-2)

    # 3) Column-tiled (w2 output-axis tiled) path forced at a small size; this
    #    is the configuration used for large Dp on v7x's 64 MiB VMEM.
    D_BIG = 256
    w1b = jax.random.normal(k1, (D_CLIP, D_BIG), jnp.float32) / math.sqrt(D_CLIP)
    b1b = jax.random.normal(k2, (D_BIG,), jnp.float32) * 0.01
    w2b = jax.random.normal(k3, (D_BIG, D_BIG), jnp.float32) / math.sqrt(D_BIG)
    b2b = jax.random.normal(k4, (D_BIG,), jnp.float32) * 0.01
    refb = projection_block_ref(x, gamma, beta, w1b, b1b, w2b, b2b)
    p_big, d_big = prepare_projection_params(gamma, beta, w1b, b1b, w2b, b2b,
                                             matmul_dtype=jnp.float32)
    out_b = jax.block_until_ready(
        projection_block_apply(x, p_big, d_big, tn=128))
    assert out_b.shape == (B, S, D_BIG)
    assert jnp.allclose(out_b, refb, atol=1e-4, rtol=1e-4)

    # 4) Odd row count (N not a multiple of the row tile): exercises the
    #    cdiv-grid / masked-tail-store path (no full-array pad of x).
    x_odd = jax.random.normal(kx, (B, 5, D_CLIP), dtype=jnp.float32)
    ref_odd = projection_block_ref(x_odd, gamma, beta, w1, b1, w2, b2)
    out_odd = jax.block_until_ready(projection_block_apply(x_odd, p_bf16, d_out))
    assert out_odd.shape == (B, 5, D_PHI2)
    assert jnp.allclose(out_odd, ref_odd, atol=5e-2, rtol=5e-2)

    print("KERNEL_OK")
</pallas_src>

<mosaic_0001>
module attributes {stable_mosaic.version = 11 : i64} {
  func.func @_projection_kernel_fused(%arg0: i32, %arg1: memref<16x32xf32, #tpu.memory_space<vmem>>, %arg2: memref<1x32xf32, #tpu.memory_space<vmem>>, %arg3: memref<1x32xf32, #tpu.memory_space<vmem>>, %arg4: memref<32x128xf32, #tpu.memory_space<vmem>>, %arg5: memref<1x128xf32, #tpu.memory_space<vmem>>, %arg6: memref<128x128xf32, #tpu.memory_space<vmem>>, %arg7: memref<1x128xf32, #tpu.memory_space<vmem>>, %arg8: memref<16x128xf32, #tpu.memory_space<vmem>>) attributes {dimension_semantics = [#tpu.dimension_semantics<parallel>], iteration_bounds = array<i64: 1>, scalar_prefetch = 0 : i64, scratch_operands = 0 : i64, tpu.core_type = #tpu.core_type<tc>, window_params = [{transform_indices = @transform_0, window_bounds = array<i64: 16, 32>}, {pipeline_mode = #tpu.pipeline_mode<synchronous>, transform_indices = @transform_1, window_bounds = array<i64: 1, 32>}, {pipeline_mode = #tpu.pipeline_mode<synchronous>, transform_indices = @transform_2, window_bounds = array<i64: 1, 32>}, {pipeline_mode = #tpu.pipeline_mode<synchronous>, transform_indices = @transform_3, window_bounds = array<i64: 32, 128>}, {pipeline_mode = #tpu.pipeline_mode<synchronous>, transform_indices = @transform_4, window_bounds = array<i64: 1, 128>}, {pipeline_mode = #tpu.pipeline_mode<synchronous>, transform_indices = @transform_5, window_bounds = array<i64: 128, 128>}, {pipeline_mode = #tpu.pipeline_mode<synchronous>, transform_indices = @transform_6, window_bounds = array<i64: 1, 128>}, {transform_indices = @transform_7, window_bounds = array<i64: 16, 128>}]} {
    %c0 = arith.constant 0 : index
    %c0_0 = arith.constant 0 : index
    %0 = vector.load %arg2[%c0, %c0_0] : memref<1x32xf32, #tpu.memory_space<vmem>>, vector<1x32xf32>
    %c0_1 = arith.constant 0 : index
    %c0_2 = arith.constant 0 : index
    %1 = vector.load %arg3[%c0_1, %c0_2] : memref<1x32xf32, #tpu.memory_space<vmem>>, vector<1x32xf32>
    %c0_3 = arith.constant 0 : index
    %c0_4 = arith.constant 0 : index
    %2 = vector.load %arg5[%c0_3, %c0_4] : memref<1x128xf32, #tpu.memory_space<vmem>>, vector<1x128xf32>
    %c0_5 = arith.constant 0 : index
    %c0_6 = arith.constant 0 : index
    %3 = vector.load %arg7[%c0_5, %c0_6] : memref<1x128xf32, #tpu.memory_space<vmem>>, vector<1x128xf32>
    %c0_7 = arith.constant 0 : index
    %c0_8 = arith.constant 0 : index
    %4 = vector.load %arg1[%c0_7, %c0_8] : memref<16x32xf32, #tpu.memory_space<vmem>>, vector<16x32xf32>
    %cst = arith.constant dense<0.000000e+00> : vector<16xf32>
    %5 = vector.multi_reduction <add>, %4, %cst [1] : vector<16x32xf32> to vector<16xf32>
    %6 = vector.shape_cast %5 : vector<16xf32> to vector<16x1xf32>
    %cst_9 = arith.constant 3.200000e+01 : f32
    %7 = vector.broadcast %cst_9 : f32 to vector<16x1xf32>
    %8 = arith.divf %6, %7 : vector<16x1xf32>
    %9 = arith.mulf %4, %4 : vector<16x32xf32>
    %cst_10 = arith.constant dense<0.000000e+00> : vector<16xf32>
    %10 = vector.multi_reduction <add>, %9, %cst_10 [1] : vector<16x32xf32> to vector<16xf32>
    %11 = vector.shape_cast %10 : vector<16xf32> to vector<16x1xf32>
    %cst_11 = arith.constant 3.200000e+01 : f32
    %12 = vector.broadcast %cst_11 : f32 to vector<16x1xf32>
    %13 = arith.divf %11, %12 : vector<16x1xf32>
    %14 = arith.mulf %8, %8 : vector<16x1xf32>
    %15 = arith.subf %13, %14 : vector<16x1xf32>
    %cst_12 = arith.constant 0.000000e+00 : f32
    %16 = vector.broadcast %cst_12 : f32 to vector<16x1xf32>
    %17 = arith.maximumf %15, %16 : vector<16x1xf32>
    %18 = vector.broadcast %8 : vector<16x1xf32> to vector<16x32xf32>
    %19 = arith.subf %4, %18 : vector<16x32xf32>
    %cst_13 = arith.constant 9.99999974E-6 : f32
    %20 = vector.broadcast %cst_13 : f32 to vector<16x1xf32>
    %21 = arith.addf %17, %20 : vector<16x1xf32>
    %22 = math.rsqrt %21 : vector<16x1xf32>
    %23 = vector.broadcast %22 : vector<16x1xf32> to vector<16x32xf32>
    %24 = arith.mulf %19, %23 : vector<16x32xf32>
    %25 = vector.broadcast %0 : vector<1x32xf32> to vector<16x32xf32>
    %26 = arith.mulf %24, %25 : vector<16x32xf32>
    %27 = vector.broadcast %1 : vector<1x32xf32> to vector<16x32xf32>
    %28 = arith.addf %26, %27 : vector<16x32xf32>
    %c0_14 = arith.constant 0 : index
    %c0_15 = arith.constant 0 : index
    %29 = vector.load %arg4[%c0_14, %c0_15] : memref<32x128xf32, #tpu.memory_space<vmem>>, vector<32x128xf32>
    %cst_16 = arith.constant dense<0.000000e+00> : vector<16x128xf32>
    %30 = tpu.matmul %28, %29, %cst_16 {dimension_numbers = #tpu.dot_dimension_numbers<[1], [0], [0], [1], [0, 0, 1, 1], [], []>} : vector<16x32xf32>, vector<32x128xf32>, vector<16x128xf32> -> vector<16x128xf32>
    %31 = vector.broadcast %2 : vector<1x128xf32> to vector<16x128xf32>
    %32 = arith.addf %30, %31 : vector<16x128xf32>
    %cst_17 = arith.constant 5.000000e-01 : f32
    %33 = vector.broadcast %cst_17 : f32 to vector<16x128xf32>
    %34 = arith.mulf %33, %32 : vector<16x128xf32>
    %cst_18 = arith.constant 0.707106769 : f32
    %35 = vector.broadcast %cst_18 : f32 to vector<16x128xf32>
    %36 = arith.mulf %32, %35 : vector<16x128xf32>
    %37 = math.erf %36 : vector<16x128xf32>
    %cst_19 = arith.constant 1.000000e+00 : f32
    %38 = vector.broadcast %cst_19 : f32 to vector<16x128xf32>
    %39 = arith.addf %38, %37 : vector<16x128xf32>
    %40 = arith.mulf %34, %39 : vector<16x128xf32>
    %c0_20 = arith.constant 0 : index
    %c0_21 = arith.constant 0 : index
    %41 = vector.load %arg6[%c0_20, %c0_21] : memref<128x128xf32, #tpu.memory_space<vmem>>, vector<128x128xf32>
    %cst_22 = arith.constant dense<0.000000e+00> : vector<16x128xf32>
    %42 = tpu.matmul %40, %41, %cst_22 {dimension_numbers = #tpu.dot_dimension_numbers<[1], [0], [0], [1], [0, 0, 1, 1], [], []>} : vector<16x128xf32>, vector<128x128xf32>, vector<16x128xf32> -> vector<16x128xf32>
    %43 = vector.broadcast %3 : vector<1x128xf32> to vector<16x128xf32>
    %44 = arith.addf %42, %43 : vector<16x128xf32>
    %c0_23 = arith.constant 0 : index
    %c0_24 = arith.constant 0 : index
    %45 = vector.load %arg8[%c0_23, %c0_24] : memref<16x128xf32, #tpu.memory_space<vmem>>, vector<16x128xf32>
    tpu.vector_store %arg8[%c0_23, %c0_24], %44 {strides = array<i32>} : memref<16x128xf32, #tpu.memory_space<vmem>>, vector<16x128xf32>,
    return
  }
  func.func @transform_0(%arg0: i32) -> (i32, i32) {
    %c0_i32 = arith.constant 0 : i32
    %c0_i32_0 = arith.constant 0 : i32
    return %arg0, %c0_i32 : i32, i32
  }
  func.func @transform_1(%arg0: i32) -> (i32, i32) {
    %c0_i32 = arith.constant 0 : i32
    %c0_i32_0 = arith.constant 0 : i32
    %c0_i32_1 = arith.constant 0 : i32
    return %c0_i32, %c0_i32_0 : i32, i32
  }
  func.func @transform_2(%arg0: i32) -> (i32, i32) {
    %c0_i32 = arith.constant 0 : i32
    %c0_i32_0 = arith.constant 0 : i32
    %c0_i32_1 = arith.constant 0 : i32
    return %c0_i32, %c0_i32_0 : i32, i32
  }
  func.func @transform_3(%arg0: i32) -> (i32, i32) {
    %c0_i32 = arith.constant 0 : i32
    %c0_i32_0 = arith.constant 0 : i32
    %c0_i32_1 = arith.constant 0 : i32
    return %c0_i32, %c0_i32_0 : i32, i32
  }
  func.func @transform_4(%arg0: i32) -> (i32, i32) {
    %c0_i32 = arith.constant 0 : i32
    %c0_i32_0 = arith.constant 0 : i32
    %c0_i32_1 = arith.constant 0 : i32
    return %c0_i32, %c0_i32_0 : i32, i32
  }
  func.func @transform_5(%arg0: i32) -> (i32, i32) {
    %c0_i32 = arith.constant 0 : i32
    %c0_i32_0 = arith.constant 0 : i32
    %c0_i32_1 = arith.constant 0 : i32
    return %c0_i32, %c0_i32_0 : i32, i32
  }
  func.func @transform_6(%arg0: i32) -> (i32, i32) {
    %c0_i32 = arith.constant 0 : i32
    %c0_i32_0 = arith.constant 0 : i32
    %c0_i32_1 = arith.constant 0 : i32
    return %c0_i32, %c0_i32_0 : i32, i32
  }
  func.func @transform_7(%arg0: i32) -> (i32, i32) {
    %c0_i32 = arith.constant 0 : i32
    %c0_i32_0 = arith.constant 0 : i32
    return %arg0, %c0_i32 : i32, i32
  }
}

module attributes {stable_mosaic.version = 11 : i64} {
  func.func @_projection_kernel_fused(%arg0: i32, %arg1: memref<16x32xf32, #tpu.memory_space<vmem>>, %arg2: memref<1x32xf32, #tpu.memory_space<vmem>>, %arg3: memref<1x32xf32, #tpu.memory_space<vmem>>, %arg4: memref<32x128xf32, #tpu.memory_space<vmem>>, %arg5: memref<1x128xf32, #tpu.memory_space<vmem>>, %arg6: memref<128x128xf32, #tpu.memory_space<vmem>>, %arg7: memref<1x128xf32, #tpu.memory_space<vmem>>, %arg8: memref<16x128xf32, #tpu.memory_space<vmem>>) attributes {dimension_semantics = [#tpu.dimension_semantics<parallel>], iteration_bounds = array<i64: 1>, scalar_prefetch = 0 : i64, scratch_operands = 0 : i64, tpu.core_type = #tpu.core_type<tc>, window_params = [{transform_indices = @transform_0, window_bounds = array<i64: 16, 32>}, {pipeline_mode = #tpu.pipeline_mode<synchronous>, transform_indices = @transform_1, window_bounds = array<i64: 1, 32>}, {pipeline_mode = #tpu.pipeline_mode<synchronous>, transform_indices = @transform_2, window_bounds = array<i64: 1, 32>}, {pipeline_mode = #tpu.pipeline_mode<synchronous>, transform_indices = @transform_3, window_bounds = array<i64: 32, 128>}, {pipeline_mode = #tpu.pipeline_mode<synchronous>, transform_indices = @transform_4, window_bounds = array<i64: 1, 128>}, {pipeline_mode = #tpu.pipeline_mode<synchronous>, transform_indices = @transform_5, window_bounds = array<i64: 128, 128>}, {pipeline_mode = #tpu.pipeline_mode<synchronous>, transform_indices = @transform_6, window_bounds = array<i64: 1, 128>}, {transform_indices = @transform_7, window_bounds = array<i64: 16, 128>}]} {
    %c0 = arith.constant 0 : index
    %c0_0 = arith.constant 0 : index
    %0 = vector.load %arg2[%c0, %c0_0] : memref<1x32xf32, #tpu.memory_space<vmem>>, vector<1x32xf32>
    %c0_1 = arith.constant 0 : index
    %c0_2 = arith.constant 0 : index
    %1 = vector.load %arg3[%c0_1, %c0_2] : memref<1x32xf32, #tpu.memory_space<vmem>>, vector<1x32xf32>
    %c0_3 = arith.constant 0 : index
    %c0_4 = arith.constant 0 : index
    %2 = vector.load %arg5[%c0_3, %c0_4] : memref<1x128xf32, #tpu.memory_space<vmem>>, vector<1x128xf32>
    %c0_5 = arith.constant 0 : index
    %c0_6 = arith.constant 0 : index
    %3 = vector.load %arg7[%c0_5, %c0_6] : memref<1x128xf32, #tpu.memory_space<vmem>>, vector<1x128xf32>
    %c0_7 = arith.constant 0 : index
    %c0_8 = arith.constant 0 : index
    %4 = vector.load %arg1[%c0_7, %c0_8] : memref<16x32xf32, #tpu.memory_space<vmem>>, vector<16x32xf32>
    %cst = arith.constant dense<0.000000e+00> : vector<16xf32>
    %5 = vector.multi_reduction <add>, %4, %cst [1] : vector<16x32xf32> to vector<16xf32>
    %6 = vector.shape_cast %5 : vector<16xf32> to vector<16x1xf32>
    %cst_9 = arith.constant 3.200000e+01 : f32
    %7 = vector.broadcast %cst_9 : f32 to vector<16x1xf32>
    %8 = arith.divf %6, %7 : vector<16x1xf32>
    %9 = arith.mulf %4, %4 : vector<16x32xf32>
    %cst_10 = arith.constant dense<0.000000e+00> : vector<16xf32>
    %10 = vector.multi_reduction <add>, %9, %cst_10 [1] : vector<16x32xf32> to vector<16xf32>
    %11 = vector.shape_cast %10 : vector<16xf32> to vector<16x1xf32>
    %cst_11 = arith.constant 3.200000e+01 : f32
    %12 = vector.broadcast %cst_11 : f32 to vector<16x1xf32>
    %13 = arith.divf %11, %12 : vector<16x1xf32>
    %14 = arith.mulf %8, %8 : vector<16x1xf32>
    %15 = arith.subf %13, %14 : vector<16x1xf32>
    %cst_12 = arith.constant 0.000000e+00 : f32
    %16 = vector.broadcast %cst_12 : f32 to vector<16x1xf32>
    %17 = arith.maximumf %15, %16 : vector<16x1xf32>
    %18 = vector.broadcast %8 : vector<16x1xf32> to vector<16x32xf32>
    %19 = arith.subf %4, %18 : vector<16x32xf32>
    %cst_13 = arith.constant 9.99999974E-6 : f32
    %20 = vector.broadcast %cst_13 : f32 to vector<16x1xf32>
    %21 = arith.addf %17, %20 : vector<16x1xf32>
    %22 = math.rsqrt %21 : vector<16x1xf32>
    %23 = vector.broadcast %22 : vector<16x1xf32> to vector<16x32xf32>
    %24 = arith.mulf %19, %23 : vector<16x32xf32>
    %25 = vector.broadcast %0 : vector<1x32xf32> to vector<16x32xf32>
    %26 = arith.mulf %24, %25 : vector<16x32xf32>
    %27 = vector.broadcast %1 : vector<1x32xf32> to vector<16x32xf32>
    %28 = arith.addf %26, %27 : vector<16x32xf32>
    %c0_14 = arith.constant 0 : index
    %c0_15 = arith.constant 0 : index
    %29 = vector.load %arg4[%c0_14, %c0_15] : memref<32x128xf32, #tpu.memory_space<vmem>>, vector<32x128xf32>
    %cst_16 = arith.constant dense<0.000000e+00> : vector<16x128xf32>
    %30 = tpu.matmul %28, %29, %cst_16 {dimension_numbers = #tpu.dot_dimension_numbers<[1], [0], [0], [1], [0, 0, 1, 1], [], []>} : vector<16x32xf32>, vector<32x128xf32>, vector<16x128xf32> -> vector<16x128xf32>
    %31 = vector.broadcast %2 : vector<1x128xf32> to vector<16x128xf32>
    %32 = arith.addf %30, %31 : vector<16x128xf32>
    %cst_17 = arith.constant 5.000000e-01 : f32
    %33 = vector.broadcast %cst_17 : f32 to vector<16x128xf32>
    %34 = arith.mulf %33, %32 : vector<16x128xf32>
    %cst_18 = arith.constant 0.707106769 : f32
    %35 = vector.broadcast %cst_18 : f32 to vector<16x128xf32>
    %36 = arith.mulf %32, %35 : vector<16x128xf32>
    %37 = math.erf %36 : vector<16x128xf32>
    %cst_19 = arith.constant 1.000000e+00 : f32
    %38 = vector.broadcast %cst_19 : f32 to vector<16x128xf32>
    %39 = arith.addf %38, %37 : vector<16x128xf32>
    %40 = arith.mulf %34, %39 : vector<16x128xf32>
    %c0_20 = arith.constant 0 : index
    %c0_21 = arith.constant 0 : index
    %41 = vector.load %arg6[%c0_20, %c0_21] : memref<128x128xf32, #tpu.memory_space<vmem>>, vector<128x128xf32>
    %cst_22 = arith.constant dense<0.000000e+00> : vector<16x128xf32>
    %42 = tpu.matmul %40, %41, %cst_22 {dimension_numbers = #tpu.dot_dimension_numbers<[1], [0], [0], [1], [0, 0, 1, 1], [], []>} : vector<16x128xf32>, vector<128x128xf32>, vector<16x128xf32> -> vector<16x128xf32>
    %43 = vector.broadcast %3 : vector<1x128xf32> to vector<16x128xf32>
    %44 = arith.addf %42, %43 : vector<16x128xf32>
    %c0_23 = arith.constant 0 : index
    %c0_24 = arith.constant 0 : index
    %45 = vector.load %arg8[%c0_23, %c0_24] : memref<16x128xf32, #tpu.memory_space<vmem>>, vector<16x128xf32>
    tpu.vector_store %arg8[%c0_23, %c0_24], %44 {strides = array<i32>} : memref<16x128xf32, #tpu.memory_space<vmem>>, vector<16x128xf32>,
    return
  }
  func.func @transform_0(%arg0: i32) -> (i32, i32) {
    %c0_i32 = arith.constant 0 : i32
    %c0_i32_0 = arith.constant 0 : i32
    return %arg0, %c0_i32 : i32, i32
  }
  func.func @transform_1(%arg0: i32) -> (i32, i32) {
    %c0_i32 = arith.constant 0 : i32
    %c0_i32_0 = arith.constant 0 : i32
    %c0_i32_1 = arith.constant 0 : i32
    return %c0_i32, %c0_i32_0 : i32, i32
  }
  func.func @transform_2(%arg0: i32) -> (i32, i32) {
    %c0_i32 = arith.constant 0 : i32
    %c0_i32_0 = arith.constant 0 : i32
    %c0_i32_1 = arith.constant 0 : i32
    return %c0_i32, %c0_i32_0 : i32, i32
  }
  func.func @transform_3(%arg0: i32) -> (i32, i32) {
    %c0_i32 = arith.constant 0 : i32
    %c0_i32_0 = arith.constant 0 : i32
    %c0_i32_1 = arith.constant 0 : i32
    return %c0_i32, %c0_i32_0 : i32, i32
  }
  func.func @transform_4(%arg0: i32) -> (i32, i32) {
    %c0_i32 = arith.constant 0 : i32
    %c0_i32_0 = arith.constant 0 : i32
    %c0_i32_1 = arith.constant 0 : i32
    return %c0_i32, %c0_i32_0 : i32, i32
  }
  func.func @transform_5(%arg0: i32) -> (i32, i32) {
    %c0_i32 = arith.constant 0 : i32
    %c0_i32_0 = arith.constant 0 : i32
    %c0_i32_1 = arith.constant 0 : i32
    return %c0_i32, %c0_i32_0 : i32, i32
  }
  func.func @transform_6(%arg0: i32) -> (i32, i32) {
    %c0_i32 = arith.constant 0 : i32
    %c0_i32_0 = arith.constant 0 : i32
    %c0_i32_1 = arith.constant 0 : i32
    return %c0_i32, %c0_i32_0 : i32, i32
  }
  func.func @transform_7(%arg0: i32) -> (i32, i32) {
    %c0_i32 = arith.constant 0 : i32
    %c0_i32_0 = arith.constant 0 : i32
    return %arg0, %c0_i32 : i32, i32
  }
}

</mosaic_0001>

<llo_original>
// kernel: tpu_custom_call.1
$region0: #{tpu_custom_call.1}
  #allocation0 [shape = 'u32[]', space=smem, size = 0x4, offset = 0x4, fixed_abs, tag = 'smem constant byte address 0x4 - core index']
  #allocation1 [shape = 'u32[144,128]{1,0:T(1,128)}', space=vmem, size = 0x12000, scoped, tag = 'internal scratch']
  %s0 = inlined_call_operand.hbm [shape: f32[16,32], index: 0, kind: input, shape index: {}]
  %s1 = inlined_call_operand.vmem [shape: f32[1,32], index: 1, kind: input, shape index: {}]
  %s2 = inlined_call_operand.vmem [shape: f32[1,32], index: 2, kind: input, shape index: {}]
  %s3 = inlined_call_operand.hbm [shape: f32[32,128], index: 3, kind: input, shape index: {}]
  %s4 = inlined_call_operand.vmem [shape: f32[1,128], index: 4, kind: input, shape index: {}]
  %s5 = inlined_call_operand.hbm [shape: f32[128,128], index: 5, kind: input, shape index: {}]
  %s6 = inlined_call_operand.vmem [shape: f32[1,128], index: 6, kind: input, shape index: {}]
  %s7 = inlined_call_operand.hbm [shape: f32[16,128], index: 7, kind: output, shape index: {}]
  %s8 = sld [smem:[#allocation0]]
  $region50: #{tpu_custom_call.1} parent=0
    _
  %s10 = ssub.s32 1, %s8
  %s11 = scalar_select 0, %s10, %s8
  $region1: #{tpu_custom_call.1} parent=0
    #allocation2 [shape = 'u8[8192]{0}', space=vmem, size = 0x2000, scoped, tag = 'input window, operand 0, single buffered']
    #allocation3 [shape = 's32[1]{0}', space=sflag, size = 0x4, scoped, tag = 'scoped memory for tpu_custom_call.1']
    #allocation4 [shape = 's32[1]{0}', space=sflag, size = 0x4, scoped, tag = 'scoped memory for tpu_custom_call.1']
    #allocation5 [shape = 'u8[16384]{0}', space=vmem, size = 0x4000, scoped, tag = 'input window, operand 3, single buffered']
    #allocation6 [shape = 's32[1]{0}', space=sflag, size = 0x4, scoped, tag = 'scoped memory for tpu_custom_call.1']
    #allocation7 [shape = 'u8[65536]{0}', space=vmem, size = 0x10000, scoped, tag = 'input window, operand 5, single buffered']
    #allocation8 [shape = 'u8[8192]{0}', space=vmem, size = 0x2000, scoped, tag = 'output window, operand 0, single buffered']
    %12 = vsyncpa [#allocation3], 0
    %13 = vsyncpa [#allocation6], 0
    %14 = vsyncpa [#allocation4], 0
    // Predicated region
    $region2: #{tpu_custom_call.1} parent=1 // pred_check
      _
    $region3: #{tpu_custom_call.1} parent=1 // pred_check_branch
      %16 = sbr.rel (0) target = $region5
    $region4: #{tpu_custom_call.1} parent=1 // pred_region
      %s18 = ssub.s32 256, 256
      %19 = vsyncadd [#allocation3], %s18
      %s20 = sshll.u32 [#allocation2], 4
      %s21 = int_to_ptr.vmem [resolvable:$true] %s20
      %26 = dma.hbm_to_vmem [thread:$0]  %s0, 256, %s21, [#allocation3], 128, 128, 8
    $region5: #{tpu_custom_call.1} parent=1 // pred_fallthru
      _
    // Predicated region
    $region6: #{tpu_custom_call.1} parent=1 // pred_check
      _
    $region7: #{tpu_custom_call.1} parent=1 // pred_check_branch
      %28 = sbr.rel (0) target = $region9
    $region8: #{tpu_custom_call.1} parent=1 // pred_region
      _
    $region9: #{tpu_custom_call.1} parent=1 // pred_fallthru
      _
    // Predicated region
    $region10: #{tpu_custom_call.1} parent=1 // pred_check
      _
    $region11: #{tpu_custom_call.1} parent=1 // pred_check_branch
      %30 = sbr.rel (0) target = $region13
    $region12: #{tpu_custom_call.1} parent=1 // pred_region
      _
    $region13: #{tpu_custom_call.1} parent=1 // pred_fallthru
      _
    // Predicated region
    $region14: #{tpu_custom_call.1} parent=1 // pred_check
      _
    $region15: #{tpu_custom_call.1} parent=1 // pred_check_branch
      %32 = sbr.rel (0) target = $region17
    $region16: #{tpu_custom_call.1} parent=1 // pred_region
      %s34 = ssub.s32 512, 512
      %35 = vsyncadd [#allocation6], %s34
      %s36 = sshll.u32 [#allocation5], 4
      %s37 = int_to_ptr.vmem [resolvable:$true] %s36
      %42 = dma.hbm_to_vmem [thread:$0]  %s3, 512, %s37, [#allocation6], 128, 128, 8
    $region17: #{tpu_custom_call.1} parent=1 // pred_fallthru
      _
    // Predicated region
    $region18: #{tpu_custom_call.1} parent=1 // pred_check
      _
    $region19: #{tpu_custom_call.1} parent=1 // pred_check_branch
      %44 = sbr.rel (0) target = $region21
    $region20: #{tpu_custom_call.1} parent=1 // pred_region
      _
    $region21: #{tpu_custom_call.1} parent=1 // pred_fallthru
      _
    // Predicated region
    $region22: #{tpu_custom_call.1} parent=1 // pred_check
      _
    $region23: #{tpu_custom_call.1} parent=1 // pred_check_branch
      %46 = sbr.rel (0) target = $region25
    $region24: #{tpu_custom_call.1} parent=1 // pred_region
      %s48 = ssub.s32 2048, 2048
      %49 = vsyncadd [#allocation6], %s48
      %s50 = sshll.u32 [#allocation7], 4
      %s51 = int_to_ptr.vmem [resolvable:$true] %s50
      %56 = dma.hbm_to_vmem [thread:$0]  %s5, 2048, %s51, [#allocation6], 128, 128, 8
    $region25: #{tpu_custom_call.1} parent=1 // pred_fallthru
      _
    // Predicated region
    $region26: #{tpu_custom_call.1} parent=1 // pred_check
      _
    $region27: #{tpu_custom_call.1} parent=1 // pred_check_branch
      %58 = sbr.rel (0) target = $region29
    $region28: #{tpu_custom_call.1} parent=1 // pred_region
      _
    $region29: #{tpu_custom_call.1} parent=1 // pred_fallthru
      _
    // Predicated region
    $region30: #{tpu_custom_call.1} parent=1 // pred_check
      _
    $region31: #{tpu_custom_call.1} parent=1 // pred_check_branch
      %60 = sbr.rel (0) target = $region33
    $region32: #{tpu_custom_call.1} parent=1 // pred_region
      %61 = dma.done [#allocation3], 256
    $region33: #{tpu_custom_call.1} parent=1 // pred_fallthru
      _
    // Predicated region
    $region34: #{tpu_custom_call.1} parent=1 // pred_check
      _
    $region35: #{tpu_custom_call.1} parent=1 // pred_check_branch
      %63 = sbr.rel (0) target = $region37
    $region36: #{tpu_custom_call.1} parent=1 // pred_region
      %64 = dma.done [#allocation6], 512
    $region37: #{tpu_custom_call.1} parent=1 // pred_fallthru
      _
    // Predicated region
    $region38: #{tpu_custom_call.1} parent=1 // pred_check
      _
    $region39: #{tpu_custom_call.1} parent=1 // pred_check_branch
      %66 = sbr.rel (0) target = $region41
    $region40: #{tpu_custom_call.1} parent=1 // pred_region
      %67 = dma.done [#allocation6], 2048
    $region41: #{tpu_custom_call.1} parent=1 // pred_fallthru
      _
    %v68 = vld [vmem:[%s1] sm:$0x1]
    %v69 = vld [vmem:[%s2] sm:$0x1]
    %v70 = vld [vmem:[%s4] sm:$0x1]
    %v71 = vld [vmem:[%s6] sm:$0x1]
    %v72 = vld [vmem:[#allocation2] sm:$0xff]
    %v73 = vld [vmem:[#allocation2 + $0x8] sm:$0xff]
    %vm74 = vcmask 261120
    %v75 = vsel %vm74, %v72, 0.0
    %76 = vadd.xlane.f32.xlu0 %v75
    %v77 = vpop.xlane.xlu0 %76
    %v78 = vsel %vm74, %v73, 0.0
    %79 = vadd.xlane.f32.xlu0 %v78
    %v80 = vpop.xlane.xlu0 %79
    %v81 = vrcp.pop 32.0
    %v82 = vmul.f32 %v77, %v81
    %v83 = vmul.f32 %v80, %v81
    %v84 = vmul.f32 %v72, %v72
    %v85 = vmul.f32 %v73, %v73
    %v86 = vsel %vm74, %v84, 0.0
    %87 = vadd.xlane.f32.xlu0 %v86
    %v88 = vpop.xlane.xlu0 %87
    %v89 = vsel %vm74, %v85, 0.0
    %90 = vadd.xlane.f32.xlu0 %v89
    %v91 = vpop.xlane.xlu0 %90
    %v92 = vmul.f32 %v88, %v81
    %v93 = vmul.f32 %v91, %v81
    %v94 = vmul.f32 %v82, %v82
    %v95 = vmul.f32 %v83, %v83
    %v96 = vsub.f32 %v92, %v94
    %v97 = vsub.f32 %v93, %v95
    %v98 = vmax.f32 %v96, 0.0
    %v99 = vmax.f32 %v97, 0.0
    %v100 = vsub.f32 %v72, %v82
    %v101 = vsub.f32 %v73, %v83
    %v102 = vadd.f32 %v98, 1e-05
    %v103 = vadd.f32 %v99, 1e-05
    %v104 = vrsqrt.pop %v102
    %v105 = vrsqrt.pop %v103
    %v106 = vmul.f32 %v100, %v104
    %v107 = vmul.f32 %v101, %v105
    %v109 = vlaneseq
    %v110 = vshrl.u32 %v109, 7
    %v111 = vsub.s32 0, %v110
    %v112 = vrot.slane %v68, %v111
    %v114 = vmul.f32 %v106, %v112
    %v115 = vmul.f32 %v107, %v112
    %v117 = vlaneseq
    %v118 = vshrl.u32 %v117, 7
    %v119 = vsub.s32 0, %v118
    %v120 = vrot.slane %v69, %v119
    %v122 = vadd.f32 %v114, %v120
    %v123 = vadd.f32 %v115, %v120
    %v124 = vld [vmem:[#allocation5] sm:$0xff]
    %v125 = vld [vmem:[#allocation5 + $0x8] sm:$0xff]
    %v126 = vld [vmem:[#allocation5 + $0x10] sm:$0xff]
    %v127 = vld [vmem:[#allocation5 + $0x18] sm:$0xff]
    %v129 = vlaneseq
    %v130 = vshrl.u32 %v129, 7
    %v131 = vsub.s32 0, %v130
    %v132 = vrot.slane %v70, %v131
    %v135 = vsel %vm74, %v122, 0
    %v138 = vsel %vm74, %v123, 0
    %140 = vmatprep.subr.mxu0 0.0
    %141 = vmatpush1.msra.mxu0 %v124
    %142 = vmatprep.subr.mxu0 0.0
    %143 = vmatpush1.msra.mxu0 %v125
    %144 = vmatprep.subr.mxu0 0.0
    %145 = vmatpush1.msra.mxu0 %v126
    %146 = vmatprep.subr.mxu0 0.0
    %147 = vmatpush1.msra.mxu0 %v127
    %148 = vmatprep.subr.mxu0 0.0
    %149 = vmatpush1.msra.mxu0 0.0
    %150 = vmatprep.subr.mxu0 0.0
    %151 = vmatpush1.msra.mxu0 0.0
    %152 = vmatprep.subr.mxu0 0.0
    %153 = vmatpush1.msra.mxu0 0.0
    %154 = vmatprep.subr.mxu0 0.0
    %155 = vmatpush1.msra.mxu0 0.0
    %156 = vmatprep.subr.mxu0 0.0
    %157 = vmatpush1.msra.mxu0 0.0
    %158 = vmatprep.subr.mxu0 0.0
    %159 = vmatpush1.msra.mxu0 0.0
    %160 = vmatprep.subr.mxu0 0.0
    %161 = vmatpush1.msra.mxu0 0.0
    %162 = vmatprep.subr.mxu0 0.0
    %163 = vmatpush1.msra.mxu0 0.0
    %164 = vmatprep.subr.mxu0 0.0
    %165 = vmatpush1.msra.mxu0 0.0
    %166 = vmatprep.subr.mxu0 0.0
    %167 = vmatpush1.msra.mxu0 0.0
    %168 = vmatprep.subr.mxu0 0.0
    %169 = vmatpush1.msra.mxu0 0.0
    %170 = vmatprep.subr.mxu0 0.0
    %171 = vmatpush1.msra.mxu0 0.0
    %172 = vmatprep.subr.mxu0 0.0
    %173 = vmatpush1.msra.mxu0 0.0
    %174 = vmatprep.subr.mxu0 0.0
    %175 = vmatpush1.msra.mxu0 0.0
    %176 = vmatprep.subr.mxu0 0.0
    %177 = vmatpush1.msra.mxu0 0.0
    %178 = vmatprep.subr.mxu0 0.0
    %179 = vmatpush1.msra.mxu0 0.0
    %180 = vmatprep.subr.mxu0 0.0
    %181 = vmatpush1.msra.mxu0 0.0
    %182 = vmatprep.subr.mxu0 0.0
    %183 = vmatpush1.msra.mxu0 0.0
    %184 = vmatprep.subr.mxu0 0.0
    %185 = vmatpush1.msra.mxu0 0.0
    %186 = vmatprep.subr.mxu0 0.0
    %187 = vmatpush1.msra.mxu0 0.0
    %188 = vmatprep.subr.mxu0 0.0
    %189 = vmatpush1.msra.mxu0 0.0
    %190 = vmatprep.subr.mxu0 0.0
    %191 = vmatpush1.msra.mxu0 0.0
    %192 = vmatprep.subr.mxu0 0.0
    %193 = vmatpush1.msra.mxu0 0.0
    %194 = vmatprep.subr.mxu0 0.0
    %195 = vmatpush1.msra.mxu0 0.0
    %196 = vmatprep.subr.mxu0 0.0
    %197 = vmatpush1.msra.mxu0 0.0
    %198 = vmatprep.subr.mxu0 0.0
    %199 = vmatpush1.msra.mxu0 0.0
    %200 = vmatprep.subr.mxu0 0.0
    %201 = vmatpush1.msra.mxu0 0.0
    %202 = vmatprep.subr.mxu0 0.0
    %203 = vmatpush1.msra.mxu0 0.0
    %204 = vmatprep.mubr.f32.mxu0 0.0
    %205 = vmatmul.mubr.f32.gmra.mrb[0].mxu0 %v135
    %v206 = vpop.f32.mrb[0].mxu0
    %v207 = vadd.f32 %v132, %v206
    %v208 = vpop.f32.mrb[0].mxu0
    %209 = vmatprep.mubr.f32.mxu0 0.0
    %210 = vmatmul.mubr.f32.gmra.mrb[0].mxu0 %v138
    %v211 = vpop.f32.mrb[0].mxu0
    %v212 = vadd.f32 %v132, %v211
    %v213 = vpop.f32.mrb[0].mxu0
    %214 = vdwg.mxu0
    %v215 = vmul.f32 %v207, 0.5
    %v216 = vmul.f32 %v212, 0.5
    %v217 = vmul.f32 %v207, 0.70710677
    %v218 = vmul.f32 %v212, 0.70710677
    %v219 = verf.f32.pop %v217
    %v220 = verf.f32.pop %v218
    %v221 = vadd.f32 %v219, 1.0
    %v222 = vadd.f32 %v220, 1.0
    %v223 = vmul.f32 %v215, %v221
    %v224 = vmul.f32 %v216, %v222
    %v225 = vld [vmem:[#allocation7] sm:$0xff]
    %v226 = vld [vmem:[#allocation7 + $0x8] sm:$0xff]
    %v227 = vld [vmem:[#allocation7 + $0x10] sm:$0xff]
    %v228 = vld [vmem:[#allocation7 + $0x18] sm:$0xff]
    %v229 = vld [vmem:[#allocation7 + $0x20] sm:$0xff]
    %v230 = vld [vmem:[#allocation7 + $0x28] sm:$0xff]
    %v231 = vld [vmem:[#allocation7 + $0x30] sm:$0xff]
    %v232 = vld [vmem:[#allocation7 + $0x38] sm:$0xff]
    %v233 = vld [vmem:[#allocation7 + $0x40] sm:$0xff]
    %v234 = vld [vmem:[#allocation7 + $0x48] sm:$0xff]
    %v235 = vld [vmem:[#allocation7 + $0x50] sm:$0xff]
    %v236 = vld [vmem:[#allocation7 + $0x58] sm:$0xff]
    %v237 = vld [vmem:[#allocation7 + $0x60] sm:$0xff]
    %v238 = vld [vmem:[#allocation7 + $0x68] sm:$0xff]
    %v239 = vld [vmem:[#allocation7 + $0x70] sm:$0xff]
    %v240 = vld [vmem:[#allocation7 + $0x78] sm:$0xff]
    %v242 = vlaneseq
    %v243 = vshrl.u32 %v242, 7
    %v244 = vsub.s32 0, %v243
    %v245 = vrot.slane %v71, %v244
    %247 = vmatprep.subr.mxu0 0.0
    %248 = vmatpush1.msra.mxu0 %v225
    %249 = vmatprep.subr.mxu0 0.0
    %250 = vmatpush1.msra.mxu0 %v226
    %251 = vmatprep.subr.mxu0 0.0
    %252 = vmatpush1.msra.mxu0 %v227
    %253 = vmatprep.subr.mxu0 0.0
    %254 = vmatpush1.msra.mxu0 %v228
    %255 = vmatprep.subr.mxu0 0.0
    %256 = vmatpush1.msra.mxu0 %v229
    %257 = vmatprep.subr.mxu0 0.0
    %258 = vmatpush1.msra.mxu0 %v230
    %259 = vmatprep.subr.mxu0 0.0
    %260 = vmatpush1.msra.mxu0 %v231
    %261 = vmatprep.subr.mxu0 0.0
    %262 = vmatpush1.msra.mxu0 %v232
    %263 = vmatprep.subr.mxu0 0.0
    %264 = vmatpush1.msra.mxu0 %v233
    %265 = vmatprep.subr.mxu0 0.0
    %266 = vmatpush1.msra.mxu0 %v234
    %267 = vmatprep.subr.mxu0 0.0
    %268 = vmatpush1.msra.mxu0 %v235
    %269 = vmatprep.subr.mxu0 0.0
    %270 = vmatpush1.msra.mxu0 %v236
    %271 = vmatprep.subr.mxu0 0.0
    %272 = vmatpush1.msra.mxu0 %v237
    %273 = vmatprep.subr.mxu0 0.0
    %274 = vmatpush1.msra.mxu0 %v238
    %275 = vmatprep.subr.mxu0 0.0
    %276 = vmatpush1.msra.mxu0 %v239
    %277 = vmatprep.subr.mxu0 0.0
    %278 = vmatpush1.msra.mxu0 %v240
    %279 = vmatprep.subr.mxu0 0.0
    %280 = vmatpush1.msra.mxu0 0.0
    %281 = vmatprep.subr.mxu0 0.0
    %282 = vmatpush1.msra.mxu0 0.0
    %283 = vmatprep.subr.mxu0 0.0
    %284 = vmatpush1.msra.mxu0 0.0
    %285 = vmatprep.subr.mxu0 0.0
    %286 = vmatpush1.msra.mxu0 0.0
    %287 = vmatprep.subr.mxu0 0.0
    %288 = vmatpush1.msra.mxu0 0.0
    %289 = vmatprep.subr.mxu0 0.0
    %290 = vmatpush1.msra.mxu0 0.0
    %291 = vmatprep.subr.mxu0 0.0
    %292 = vmatpush1.msra.mxu0 0.0
    %293 = vmatprep.subr.mxu0 0.0
    %294 = vmatpush1.msra.mxu0 0.0
    %295 = vmatprep.subr.mxu0 0.0
    %296 = vmatpush1.msra.mxu0 0.0
    %297 = vmatprep.subr.mxu0 0.0
    %298 = vmatpush1.msra.mxu0 0.0
    %299 = vmatprep.subr.mxu0 0.0
    %300 = vmatpush1.msra.mxu0 0.0
    %301 = vmatprep.subr.mxu0 0.0
    %302 = vmatpush1.msra.mxu0 0.0
    %303 = vmatprep.subr.mxu0 0.0
    %304 = vmatpush1.msra.mxu0 0.0
    %305 = vmatprep.subr.mxu0 0.0
    %306 = vmatpush1.msra.mxu0 0.0
    %307 = vmatprep.subr.mxu0 0.0
    %308 = vmatpush1.msra.mxu0 0.0
    %309 = vmatprep.subr.mxu0 0.0
    %310 = vmatpush1.msra.mxu0 0.0
    %311 = vmatprep.mubr.f32.mxu0 0.0
    %312 = vmatmul.mubr.f32.gmra.mrb[0].mxu0 %v223
    %v313 = vpop.f32.mrb[0].mxu0
    %v314 = vadd.f32 %v245, %v313
    %v315 = vpop.f32.mrb[0].mxu0
    %316 = vmatprep.mubr.f32.mxu0 0.0
    %317 = vmatmul.mubr.f32.gmra.mrb[0].mxu0 %v224
    %v318 = vpop.f32.mrb[0].mxu0
    %v319 = vadd.f32 %v245, %v318
    %v320 = vpop.f32.mrb[0].mxu0
    %321 = vdwg.mxu0
    %322 = vst [vmem:[#allocation8] sm:$0xff] %v314
    %323 = vst [vmem:[#allocation8 + $0x8] sm:$0xff] %v319
    // Predicated region
    $region42: #{tpu_custom_call.1} parent=1 // pred_check
      _
    $region43: #{tpu_custom_call.1} parent=1 // pred_check_branch
      %325 = sbr.rel (0) target = $region45
    $region44: #{tpu_custom_call.1} parent=1 // pred_region
      %s327 = ssub.s32 256, 256
      %328 = vsyncadd [#allocation4], %s327
      %s329 = sshll.u32 [#allocation8], 4
      %s330 = int_to_ptr.vmem [resolvable:$true] %s329
      %335 = dma.vmem_to_hbm [thread:$0]  %s330, 256, %s7, [#allocation4], 128, 128, 8
    $region45: #{tpu_custom_call.1} parent=1 // pred_fallthru
      _
    // Predicated region
    $region46: #{tpu_custom_call.1} parent=1 // pred_check
      _
    $region47: #{tpu_custom_call.1} parent=1 // pred_check_branch
      %337 = sbr.rel (0) target = $region49
    $region48: #{tpu_custom_call.1} parent=1 // pred_region
      %338 = dma.done [#allocation4], 256
    $region49: #{tpu_custom_call.1} parent=1 // pred_fallthru
      _
    %339 = vsyncpa [#allocation3], 1
    %340 = vsyncpa [#allocation6], 1
    %341 = vsyncpa [#allocation4], 1

// kernel: tpu_custom_call.1
$region0: #{tpu_custom_call.1}
  #allocation0 [shape = 'u32[]', space=smem, size = 0x4, offset = 0x4, fixed_abs, tag = 'smem constant byte address 0x4 - core index']
  #allocation1 [shape = 'u32[144,128]{1,0:T(1,128)}', space=vmem, size = 0x12000, scoped, tag = 'internal scratch']
  %s0 = inlined_call_operand.hbm [shape: f32[16,32], index: 0, kind: input, shape index: {}]
  %s1 = inlined_call_operand.vmem [shape: f32[1,32], index: 1, kind: input, shape index: {}]
  %s2 = inlined_call_operand.vmem [shape: f32[1,32], index: 2, kind: input, shape index: {}]
  %s3 = inlined_call_operand.hbm [shape: f32[32,128], index: 3, kind: input, shape index: {}]
  %s4 = inlined_call_operand.vmem [shape: f32[1,128], index: 4, kind: input, shape index: {}]
  %s5 = inlined_call_operand.hbm [shape: f32[128,128], index: 5, kind: input, shape index: {}]
  %s6 = inlined_call_operand.vmem [shape: f32[1,128], index: 6, kind: input, shape index: {}]
  %s7 = inlined_call_operand.hbm [shape: f32[16,128], index: 7, kind: output, shape index: {}]
  %s8 = sld [smem:[#allocation0]]
  $region50: #{tpu_custom_call.1} parent=0
    _
  %s10 = ssub.s32 1, %s8
  %s11 = scalar_select 0, %s10, %s8
  $region1: #{tpu_custom_call.1} parent=0
    #allocation2 [shape = 'u8[8192]{0}', space=vmem, size = 0x2000, scoped, tag = 'input window, operand 0, single buffered']
    #allocation3 [shape = 's32[1]{0}', space=sflag, size = 0x4, scoped, tag = 'scoped memory for tpu_custom_call.1']
    #allocation4 [shape = 's32[1]{0}', space=sflag, size = 0x4, scoped, tag = 'scoped memory for tpu_custom_call.1']
    #allocation5 [shape = 'u8[16384]{0}', space=vmem, size = 0x4000, scoped, tag = 'input window, operand 3, single buffered']
    #allocation6 [shape = 's32[1]{0}', space=sflag, size = 0x4, scoped, tag = 'scoped memory for tpu_custom_call.1']
    #allocation7 [shape = 'u8[65536]{0}', space=vmem, size = 0x10000, scoped, tag = 'input window, operand 5, single buffered']
    #allocation8 [shape = 'u8[8192]{0}', space=vmem, size = 0x2000, scoped, tag = 'output window, operand 0, single buffered']
    %12 = vsyncpa [#allocation3], 0
    %13 = vsyncpa [#allocation6], 0
    %14 = vsyncpa [#allocation4], 0
    // Predicated region
    $region2: #{tpu_custom_call.1} parent=1 // pred_check
      _
    $region3: #{tpu_custom_call.1} parent=1 // pred_check_branch
      %16 = sbr.rel (0) target = $region5
    $region4: #{tpu_custom_call.1} parent=1 // pred_region
      %s18 = ssub.s32 256, 256
      %19 = vsyncadd [#allocation3], %s18
      %s20 = sshll.u32 [#allocation2], 4
      %s21 = int_to_ptr.vmem [resolvable:$true] %s20
      %26 = dma.hbm_to_vmem [thread:$0]  %s0, 256, %s21, [#allocation3], 128, 128, 8
    $region5: #{tpu_custom_call.1} parent=1 // pred_fallthru
      _
    // Predicated region
    $region6: #{tpu_custom_call.1} parent=1 // pred_check
      _
    $region7: #{tpu_custom_call.1} parent=1 // pred_check_branch
      %28 = sbr.rel (0) target = $region9
    $region8: #{tpu_custom_call.1} parent=1 // pred_region
      _
    $region9: #{tpu_custom_call.1} parent=1 // pred_fallthru
      _
    // Predicated region
    $region10: #{tpu_custom_call.1} parent=1 // pred_check
      _
    $region11: #{tpu_custom_call.1} parent=1 // pred_check_branch
      %30 = sbr.rel (0) target = $region13
    $region12: #{tpu_custom_call.1} parent=1 // pred_region
      _
    $region13: #{tpu_custom_call.1} parent=1 // pred_fallthru
      _
    // Predicated region
    $region14: #{tpu_custom_call.1} parent=1 // pred_check
      _
    $region15: #{tpu_custom_call.1} parent=1 // pred_check_branch
      %32 = sbr.rel (0) target = $region17
    $region16: #{tpu_custom_call.1} parent=1 // pred_region
      %s34 = ssub.s32 512, 512
      %35 = vsyncadd [#allocation6], %s34
      %s36 = sshll.u32 [#allocation5], 4
      %s37 = int_to_ptr.vmem [resolvable:$true] %s36
      %42 = dma.hbm_to_vmem [thread:$0]  %s3, 512, %s37, [#allocation6], 128, 128, 8
    $region17: #{tpu_custom_call.1} parent=1 // pred_fallthru
      _
    // Predicated region
    $region18: #{tpu_custom_call.1} parent=1 // pred_check
      _
    $region19: #{tpu_custom_call.1} parent=1 // pred_check_branch
      %44 = sbr.rel (0) target = $region21
    $region20: #{tpu_custom_call.1} parent=1 // pred_region
      _
    $region21: #{tpu_custom_call.1} parent=1 // pred_fallthru
      _
    // Predicated region
    $region22: #{tpu_custom_call.1} parent=1 // pred_check
      _
    $region23: #{tpu_custom_call.1} parent=1 // pred_check_branch
      %46 = sbr.rel (0) target = $region25
    $region24: #{tpu_custom_call.1} parent=1 // pred_region
      %s48 = ssub.s32 2048, 2048
      %49 = vsyncadd [#allocation6], %s48
      %s50 = sshll.u32 [#allocation7], 4
      %s51 = int_to_ptr.vmem [resolvable:$true] %s50
      %56 = dma.hbm_to_vmem [thread:$0]  %s5, 2048, %s51, [#allocation6], 128, 128, 8
    $region25: #{tpu_custom_call.1} parent=1 // pred_fallthru
      _
    // Predicated region
    $region26: #{tpu_custom_call.1} parent=1 // pred_check
      _
    $region27: #{tpu_custom_call.1} parent=1 // pred_check_branch
      %58 = sbr.rel (0) target = $region29
    $region28: #{tpu_custom_call.1} parent=1 // pred_region
      _
    $region29: #{tpu_custom_call.1} parent=1 // pred_fallthru
      _
    // Predicated region
    $region30: #{tpu_custom_call.1} parent=1 // pred_check
      _
    $region31: #{tpu_custom_call.1} parent=1 // pred_check_branch
      %60 = sbr.rel (0) target = $region33
    $region32: #{tpu_custom_call.1} parent=1 // pred_region
      %61 = dma.done [#allocation3], 256
    $region33: #{tpu_custom_call.1} parent=1 // pred_fallthru
      _
    // Predicated region
    $region34: #{tpu_custom_call.1} parent=1 // pred_check
      _
    $region35: #{tpu_custom_call.1} parent=1 // pred_check_branch
      %63 = sbr.rel (0) target = $region37
    $region36: #{tpu_custom_call.1} parent=1 // pred_region
      %64 = dma.done [#allocation6], 512
    $region37: #{tpu_custom_call.1} parent=1 // pred_fallthru
      _
    // Predicated region
    $region38: #{tpu_custom_call.1} parent=1 // pred_check
      _
    $region39: #{tpu_custom_call.1} parent=1 // pred_check_branch
      %66 = sbr.rel (0) target = $region41
    $region40: #{tpu_custom_call.1} parent=1 // pred_region
      %67 = dma.done [#allocation6], 2048
    $region41: #{tpu_custom_call.1} parent=1 // pred_fallthru
      _
    %v68 = vld [vmem:[%s1] sm:$0x1]
    %v69 = vld [vmem:[%s2] sm:$0x1]
    %v70 = vld [vmem:[%s4] sm:$0x1]
    %v71 = vld [vmem:[%s6] sm:$0x1]
    %v72 = vld [vmem:[#allocation2] sm:$0xff]
    %v73 = vld [vmem:[#allocation2 + $0x8] sm:$0xff]
    %vm74 = vcmask 261120
    %v75 = vsel %vm74, %v72, 0.0
    %76 = vadd.xlane.f32.xlu0 %v75
    %v77 = vpop.xlane.xlu0 %76
    %v78 = vsel %vm74, %v73, 0.0
    %79 = vadd.xlane.f32.xlu0 %v78
    %v80 = vpop.xlane.xlu0 %79
    %v81 = vrcp.pop 32.0
    %v82 = vmul.f32 %v77, %v81
    %v83 = vmul.f32 %v80, %v81
    %v84 = vmul.f32 %v72, %v72
    %v85 = vmul.f32 %v73, %v73
    %v86 = vsel %vm74, %v84, 0.0
    %87 = vadd.xlane.f32.xlu0 %v86
    %v88 = vpop.xlane.xlu0 %87
    %v89 = vsel %vm74, %v85, 0.0
    %90 = vadd.xlane.f32.xlu0 %v89
    %v91 = vpop.xlane.xlu0 %90
    %v92 = vmul.f32 %v88, %v81
    %v93 = vmul.f32 %v91, %v81
    %v94 = vmul.f32 %v82, %v82
    %v95 = vmul.f32 %v83, %v83
    %v96 = vsub.f32 %v92, %v94
    %v97 = vsub.f32 %v93, %v95
    %v98 = vmax.f32 %v96, 0.0
    %v99 = vmax.f32 %v97, 0.0
    %v100 = vsub.f32 %v72, %v82
    %v101 = vsub.f32 %v73, %v83
    %v102 = vadd.f32 %v98, 1e-05
    %v103 = vadd.f32 %v99, 1e-05
    %v104 = vrsqrt.pop %v102
    %v105 = vrsqrt.pop %v103
    %v106 = vmul.f32 %v100, %v104
    %v107 = vmul.f32 %v101, %v105
    %v109 = vlaneseq
    %v110 = vshrl.u32 %v109, 7
    %v111 = vsub.s32 0, %v110
    %v112 = vrot.slane %v68, %v111
    %v114 = vmul.f32 %v106, %v112
    %v115 = vmul.f32 %v107, %v112
    %v117 = vlaneseq
    %v118 = vshrl.u32 %v117, 7
    %v119 = vsub.s32 0, %v118
    %v120 = vrot.slane %v69, %v119
    %v122 = vadd.f32 %v114, %v120
    %v123 = vadd.f32 %v115, %v120
    %v124 = vld [vmem:[#allocation5] sm:$0xff]
    %v125 = vld [vmem:[#allocation5 + $0x8] sm:$0xff]
    %v126 = vld [vmem:[#allocation5 + $0x10] sm:$0xff]
    %v127 = vld [vmem:[#allocation5 + $0x18] sm:$0xff]
    %v129 = vlaneseq
    %v130 = vshrl.u32 %v129, 7
    %v131 = vsub.s32 0, %v130
    %v132 = vrot.slane %v70, %v131
    %v135 = vsel %vm74, %v122, 0
    %v138 = vsel %vm74, %v123, 0
    %140 = vmatprep.subr.mxu0 0.0
    %141 = vmatpush1.msra.mxu0 %v124
    %142 = vmatprep.subr.mxu0 0.0
    %143 = vmatpush1.msra.mxu0 %v125
    %144 = vmatprep.subr.mxu0 0.0
    %145 = vmatpush1.msra.mxu0 %v126
    %146 = vmatprep.subr.mxu0 0.0
    %147 = vmatpush1.msra.mxu0 %v127
    %148 = vmatprep.subr.mxu0 0.0
    %149 = vmatpush1.msra.mxu0 0.0
    %150 = vmatprep.subr.mxu0 0.0
    %151 = vmatpush1.msra.mxu0 0.0
    %152 = vmatprep.subr.mxu0 0.0
    %153 = vmatpush1.msra.mxu0 0.0
    %154 = vmatprep.subr.mxu0 0.0
    %155 = vmatpush1.msra.mxu0 0.0
    %156 = vmatprep.subr.mxu0 0.0
    %157 = vmatpush1.msra.mxu0 0.0
    %158 = vmatprep.subr.mxu0 0.0
    %159 = vmatpush1.msra.mxu0 0.0
    %160 = vmatprep.subr.mxu0 0.0
    %161 = vmatpush1.msra.mxu0 0.0
    %162 = vmatprep.subr.mxu0 0.0
    %163 = vmatpush1.msra.mxu0 0.0
    %164 = vmatprep.subr.mxu0 0.0
    %165 = vmatpush1.msra.mxu0 0.0
    %166 = vmatprep.subr.mxu0 0.0
    %167 = vmatpush1.msra.mxu0 0.0
    %168 = vmatprep.subr.mxu0 0.0
    %169 = vmatpush1.msra.mxu0 0.0
    %170 = vmatprep.subr.mxu0 0.0
    %171 = vmatpush1.msra.mxu0 0.0
    %172 = vmatprep.subr.mxu0 0.0
    %173 = vmatpush1.msra.mxu0 0.0
    %174 = vmatprep.subr.mxu0 0.0
    %175 = vmatpush1.msra.mxu0 0.0
    %176 = vmatprep.subr.mxu0 0.0
    %177 = vmatpush1.msra.mxu0 0.0
    %178 = vmatprep.subr.mxu0 0.0
    %179 = vmatpush1.msra.mxu0 0.0
    %180 = vmatprep.subr.mxu0 0.0
    %181 = vmatpush1.msra.mxu0 0.0
    %182 = vmatprep.subr.mxu0 0.0
    %183 = vmatpush1.msra.mxu0 0.0
    %184 = vmatprep.subr.mxu0 0.0
    %185 = vmatpush1.msra.mxu0 0.0
    %186 = vmatprep.subr.mxu0 0.0
    %187 = vmatpush1.msra.mxu0 0.0
    %188 = vmatprep.subr.mxu0 0.0
    %189 = vmatpush1.msra.mxu0 0.0
    %190 = vmatprep.subr.mxu0 0.0
    %191 = vmatpush1.msra.mxu0 0.0
    %192 = vmatprep.subr.mxu0 0.0
    %193 = vmatpush1.msra.mxu0 0.0
    %194 = vmatprep.subr.mxu0 0.0
    %195 = vmatpush1.msra.mxu0 0.0
    %196 = vmatprep.subr.mxu0 0.0
    %197 = vmatpush1.msra.mxu0 0.0
    %198 = vmatprep.subr.mxu0 0.0
    %199 = vmatpush1.msra.mxu0 0.0
    %200 = vmatprep.subr.mxu0 0.0
    %201 = vmatpush1.msra.mxu0 0.0
    %202 = vmatprep.subr.mxu0 0.0
    %203 = vmatpush1.msra.mxu0 0.0
    %204 = vmatprep.mubr.f32.mxu0 0.0
    %205 = vmatmul.mubr.f32.gmra.mrb[0].mxu0 %v135
    %v206 = vpop.f32.mrb[0].mxu0
    %v207 = vadd.f32 %v132, %v206
    %v208 = vpop.f32.mrb[0].mxu0
    %209 = vmatprep.mubr.f32.mxu0 0.0
    %210 = vmatmul.mubr.f32.gmra.mrb[0].mxu0 %v138
    %v211 = vpop.f32.mrb[0].mxu0
    %v212 = vadd.f32 %v132, %v211
    %v213 = vpop.f32.mrb[0].mxu0
    %214 = vdwg.mxu0
    %v215 = vmul.f32 %v207, 0.5
    %v216 = vmul.f32 %v212, 0.5
    %v217 = vmul.f32 %v207, 0.70710677
    %v218 = vmul.f32 %v212, 0.70710677
    %v219 = verf.f32.pop %v217
    %v220 = verf.f32.pop %v218
    %v221 = vadd.f32 %v219, 1.0
    %v222 = vadd.f32 %v220, 1.0
    %v223 = vmul.f32 %v215, %v221
    %v224 = vmul.f32 %v216, %v222
    %v225 = vld [vmem:[#allocation7] sm:$0xff]
    %v226 = vld [vmem:[#allocation7 + $0x8] sm:$0xff]
    %v227 = vld [vmem:[#allocation7 + $0x10] sm:$0xff]
    %v228 = vld [vmem:[#allocation7 + $0x18] sm:$0xff]
    %v229 = vld [vmem:[#allocation7 + $0x20] sm:$0xff]
    %v230 = vld [vmem:[#allocation7 + $0x28] sm:$0xff]
    %v231 = vld [vmem:[#allocation7 + $0x30] sm:$0xff]
    %v232 = vld [vmem:[#allocation7 + $0x38] sm:$0xff]
    %v233 = vld [vmem:[#allocation7 + $0x40] sm:$0xff]
    %v234 = vld [vmem:[#allocation7 + $0x48] sm:$0xff]
    %v235 = vld [vmem:[#allocation7 + $0x50] sm:$0xff]
    %v236 = vld [vmem:[#allocation7 + $0x58] sm:$0xff]
    %v237 = vld [vmem:[#allocation7 + $0x60] sm:$0xff]
    %v238 = vld [vmem:[#allocation7 + $0x68] sm:$0xff]
    %v239 = vld [vmem:[#allocation7 + $0x70] sm:$0xff]
    %v240 = vld [vmem:[#allocation7 + $0x78] sm:$0xff]
    %v242 = vlaneseq
    %v243 = vshrl.u32 %v242, 7
    %v244 = vsub.s32 0, %v243
    %v245 = vrot.slane %v71, %v244
    %247 = vmatprep.subr.mxu0 0.0
    %248 = vmatpush1.msra.mxu0 %v225
    %249 = vmatprep.subr.mxu0 0.0
    %250 = vmatpush1.msra.mxu0 %v226
    %251 = vmatprep.subr.mxu0 0.0
    %252 = vmatpush1.msra.mxu0 %v227
    %253 = vmatprep.subr.mxu0 0.0
    %254 = vmatpush1.msra.mxu0 %v228
    %255 = vmatprep.subr.mxu0 0.0
    %256 = vmatpush1.msra.mxu0 %v229
    %257 = vmatprep.subr.mxu0 0.0
    %258 = vmatpush1.msra.mxu0 %v230
    %259 = vmatprep.subr.mxu0 0.0
    %260 = vmatpush1.msra.mxu0 %v231
    %261 = vmatprep.subr.mxu0 0.0
    %262 = vmatpush1.msra.mxu0 %v232
    %263 = vmatprep.subr.mxu0 0.0
    %264 = vmatpush1.msra.mxu0 %v233
    %265 = vmatprep.subr.mxu0 0.0
    %266 = vmatpush1.msra.mxu0 %v234
    %267 = vmatprep.subr.mxu0 0.0
    %268 = vmatpush1.msra.mxu0 %v235
    %269 = vmatprep.subr.mxu0 0.0
    %270 = vmatpush1.msra.mxu0 %v236
    %271 = vmatprep.subr.mxu0 0.0
    %272 = vmatpush1.msra.mxu0 %v237
    %273 = vmatprep.subr.mxu0 0.0
    %274 = vmatpush1.msra.mxu0 %v238
    %275 = vmatprep.subr.mxu0 0.0
    %276 = vmatpush1.msra.mxu0 %v239
    %277 = vmatprep.subr.mxu0 0.0
    %278 = vmatpush1.msra.mxu0 %v240
    %279 = vmatprep.subr.mxu0 0.0
    %280 = vmatpush1.msra.mxu0 0.0
    %281 = vmatprep.subr.mxu0 0.0
    %282 = vmatpush1.msra.mxu0 0.0
    %283 = vmatprep.subr.mxu0 0.0
    %284 = vmatpush1.msra.mxu0 0.0
    %285 = vmatprep.subr.mxu0 0.0
    %286 = vmatpush1.msra.mxu0 0.0
    %287 = vmatprep.subr.mxu0 0.0
    %288 = vmatpush1.msra.mxu0 0.0
    %289 = vmatprep.subr.mxu0 0.0
    %290 = vmatpush1.msra.mxu0 0.0
    %291 = vmatprep.subr.mxu0 0.0
    %292 = vmatpush1.msra.mxu0 0.0
    %293 = vmatprep.subr.mxu0 0.0
    %294 = vmatpush1.msra.mxu0 0.0
    %295 = vmatprep.subr.mxu0 0.0
    %296 = vmatpush1.msra.mxu0 0.0
    %297 = vmatprep.subr.mxu0 0.0
    %298 = vmatpush1.msra.mxu0 0.0
    %299 = vmatprep.subr.mxu0 0.0
    %300 = vmatpush1.msra.mxu0 0.0
    %301 = vmatprep.subr.mxu0 0.0
    %302 = vmatpush1.msra.mxu0 0.0
    %303 = vmatprep.subr.mxu0 0.0
    %304 = vmatpush1.msra.mxu0 0.0
    %305 = vmatprep.subr.mxu0 0.0
    %306 = vmatpush1.msra.mxu0 0.0
    %307 = vmatprep.subr.mxu0 0.0
    %308 = vmatpush1.msra.mxu0 0.0
    %309 = vmatprep.subr.mxu0 0.0
    %310 = vmatpush1.msra.mxu0 0.0
    %311 = vmatprep.mubr.f32.mxu0 0.0
    %312 = vmatmul.mubr.f32.gmra.mrb[0].mxu0 %v223
    %v313 = vpop.f32.mrb[0].mxu0
    %v314 = vadd.f32 %v245, %v313
    %v315 = vpop.f32.mrb[0].mxu0
    %316 = vmatprep.mubr.f32.mxu0 0.0
    %317 = vmatmul.mubr.f32.gmra.mrb[0].mxu0 %v224
    %v318 = vpop.f32.mrb[0].mxu0
    %v319 = vadd.f32 %v245, %v318
    %v320 = vpop.f32.mrb[0].mxu0
    %321 = vdwg.mxu0
    %322 = vst [vmem:[#allocation8] sm:$0xff] %v314
    %323 = vst [vmem:[#allocation8 + $0x8] sm:$0xff] %v319
    // Predicated region
    $region42: #{tpu_custom_call.1} parent=1 // pred_check
      _
    $region43: #{tpu_custom_call.1} parent=1 // pred_check_branch
      %325 = sbr.rel (0) target = $region45
    $region44: #{tpu_custom_call.1} parent=1 // pred_region
      %s327 = ssub.s32 256, 256
      %328 = vsyncadd [#allocation4], %s327
      %s329 = sshll.u32 [#allocation8], 4
      %s330 = int_to_ptr.vmem [resolvable:$true] %s329
      %335 = dma.vmem_to_hbm [thread:$0]  %s330, 256, %s7, [#allocation4], 128, 128, 8
    $region45: #{tpu_custom_call.1} parent=1 // pred_fallthru
      _
    // Predicated region
    $region46: #{tpu_custom_call.1} parent=1 // pred_check
      _
    $region47: #{tpu_custom_call.1} parent=1 // pred_check_branch
      %337 = sbr.rel (0) target = $region49
    $region48: #{tpu_custom_call.1} parent=1 // pred_region
      %338 = dma.done [#allocation4], 256
    $region49: #{tpu_custom_call.1} parent=1 // pred_fallthru
      _
    %339 = vsyncpa [#allocation3], 1
    %340 = vsyncpa [#allocation6], 1
    %341 = vsyncpa [#allocation4], 1

</llo_original>
